<compile_context>
chip_gen: v6e
topology: v6e:2x2x1
jax: 0.10.0
libtpu: 0.0.40
codegen_flags: <defaults>
</compile_context>

<pallas_src>
import functools
import math

import jax
import jax.numpy as jnp
import numpy as np
from jax.experimental import pallas as pl
from jax.experimental.pallas import tpu as pltpu


# ---------------------------------------------------------------------------
# Kernels
# ---------------------------------------------------------------------------

def _rowwise_softmax_kernel(x_ref, o_ref, *, approx_recip: bool):
    """Softmax over the full last axis of the block (internal_dim % 128 == 0)."""
    x = x_ref[...].astype(jnp.float32)
    m = jnp.max(x, axis=-1, keepdims=True)
    e = jnp.exp(x - m)
    s = jnp.sum(e, axis=-1, keepdims=True)
    o_ref[...] = (e * pl.reciprocal(s, approx=approx_recip)).astype(o_ref.dtype)


def _grouped_softmax_kernel(*refs, d: int, use_mxu_sum: bool,
                            approx_recip: bool, two_pass_sum: bool):
    """Softmax over contiguous groups of `d` lanes of a lane-dense block.

    Block shape is (tile_rows, L) with d | L and L a multiple of 128.  The
    group MAX is produced (already broadcast to every lane) by a log-step
    rotate-within-group tree on the XLU; the group SUM is produced on the MXU
    via a block-diagonal ones matrix (or by the same roll tree when no B matrix
    is supplied).
    """
    if use_mxu_sum:
        x_ref, b_ref, o_ref = refs
    else:
        x_ref, o_ref = refs

    x = x_ref[...].astype(jnp.float32)
    n_lanes = x.shape[-1]

    lane = jax.lax.broadcasted_iota(jnp.int32, (1, n_lanes), 1)

    # Position of each lane inside its group of `d`.
    if (d & (d - 1)) == 0:                       # power of two: cheap mask
        pos = lane & (d - 1)
    else:                                        # general d: exact float floor-div
        lane_f = lane.astype(jnp.float32)
        pos = (lane_f - jnp.floor(lane_f / float(d)) * float(d)).astype(jnp.int32)

    # One-vreg probe of pltpu.roll's sign convention so the wrap masks are
    # direction independent (a single (1, L) roll + compare per grid step).
    rolled = pltpu.roll(lane, 1, axis=1)
    expect_fwd = jnp.where(lane == n_lanes - 1, 0, lane + 1)
    roll_is_fwd = rolled == expect_fwd
    eff_pos = jnp.where(roll_is_fwd, pos, (d - 1) - pos)

    def rotate_within_group(v, shift):
        """v cyclically shifted by `shift` positions inside each group of d."""
        shift = shift % d
        if shift == 0:
            return v
        straight = pltpu.roll(v, shift, axis=1)                 # no group wrap
        wrapped = pltpu.roll(v, (shift - d) % n_lanes, axis=1)  # wraps inside group
        return jnp.where(eff_pos < (d - shift), straight, wrapped)

    def grouped_allreduce(v, op):
        """Each lane gets op-reduction over its whole group (each element once)."""
        windows, win, acc, covered, bits = v, 1, None, 0, d
        while bits:
            if bits & 1:
                if acc is None:
                    acc, covered = windows, win
                else:
                    acc = op(acc, rotate_within_group(windows, covered))
                    covered += win
            bits >>= 1
            if bits:
                windows = op(windows, rotate_within_group(windows, win))
                win *= 2
        return acc

    m = grouped_allreduce(x, jnp.maximum)        # group max, broadcast per lane
    e = jnp.exp(x - m)                           # dense exp on the EUP

    if use_mxu_sum:
        # Group sum on the otherwise-idle MXU.  B is {0,1} block-diagonal in
        # bf16, so bf16 x bf16 -> f32 products are exact; the optional hi/lo
        # split keeps the f32 denominator accurate to ~2^-18 relative.
        b = b_ref[...]
        e_hi = e.astype(jnp.bfloat16)
        s = jnp.dot(e_hi, b, preferred_element_type=jnp.float32)
        if two_pass_sum:
            e_lo = (e - e_hi.astype(jnp.float32)).astype(jnp.bfloat16)
            s = s + jnp.dot(e_lo, b, preferred_element_type=jnp.float32)
    else:
        s = grouped_allreduce(e, jnp.add)        # roll-tree fallback (rare)

    o_ref[...] = (e * pl.reciprocal(s, approx=approx_recip)).astype(o_ref.dtype)


# ---------------------------------------------------------------------------
# Static layout / tiling selection (trace-time Python)
# ---------------------------------------------------------------------------

_MXU_SUM_MAX_LANES = 1024        # cap on the (L, L) block-diagonal matrix size


def _vmem_capacity_bytes() -> int:
    try:
        info = pltpu.get_tpu_info()
        cap = int(getattr(info, "vmem_capacity_bytes", 0))
        if cap > 0:
            return cap
    except Exception:
        pass
    return 64 * 1024 * 1024      # conservative: v7x per-TensorCore VMEM


def _plan_rows(rows: int, lane_width: int, target_elems: int):
    """Pick (tile_rows, rows_padded).

    tile_rows is a multiple of 8, the grid has >=2 steps whenever rows > 8
    (v7x megacore sharding), and rows_padded is an exact multiple of tile_rows.
    A divisor of `rows` near the budget is preferred so no HBM pad copy is
    needed in the common case.
    """
    tr_target = max(8, (target_elems // max(lane_width, 1)) // 8 * 8)
    if rows <= 8:
        return 8, 8
    half = ((rows + 1) // 2 + 7) // 8 * 8        # ceil(rows/2), rounded up to 8
    tr_cap = max(8, min(tr_target, half))
    if rows % 8 == 0:
        min_ok = max(8, (tr_cap // 2) // 8 * 8)
        tr = tr_cap
        while tr >= min_ok:
            if rows % tr == 0:
                return tr, rows                  # clean tiling, no padding
            tr -= 8
    rows_pad = -(-rows // tr_cap) * tr_cap
    return tr_cap, rows_pad


# ---------------------------------------------------------------------------
# Public wrapper
# ---------------------------------------------------------------------------

@functools.partial(jax.jit, static_argnames=("internal_dim", "max_tile_elems"))
def softmax_layer(x, internal_dim: int, max_tile_elems=None):
    """Forward pass of SoftmaxLayer: grouped softmax over the last axis."""
    x_shape = x.shape
    d = int(internal_dim)
    if d <= 0 or x_shape[-1] % d != 0:
        raise ValueError("last dim must be divisible by internal_dim")

    n = math.prod(x_shape)
    dt = jnp.dtype(x.dtype)

    # Generation-aware block / VMEM budget.
    big_vmem = _vmem_capacity_bytes() >= 100 * 1024 * 1024     # v5e / v6e (128 MiB)
    if max_tile_elems is None:
        max_tile_elems = (1 << 20) if big_vmem else (384 * 1024)
    vmem_limit = (96 if big_vmem else 48) * 1024 * 1024

    # Lane-dense layout: groups never straddle a row.
    if d % 128 == 0:
        lane_width = d                                          # one group per row
        grouped = False
    else:
        lane_width = (d * 128) // math.gcd(d, 128)              # lcm(d, 128)
        grouped = True
    use_mxu_sum = grouped and lane_width <= _MXU_SUM_MAX_LANES

    rows = -(-n // lane_width)
    tile_rows, rows_pad = _plan_rows(rows, lane_width, max_tile_elems)
    n_pad = rows_pad * lane_width
    grid = (rows_pad // tile_rows,)

    # Flatten + pad with whole zero groups (d | lane_width, d | n), slice later.
    x_flat = x.reshape(-1)
    if n_pad != n:
        x_flat = jnp.pad(x_flat, (0, n_pad - n))
    x2 = x_flat.reshape(rows_pad, lane_width)

    is_f32 = dt == jnp.dtype(jnp.float32)
    approx_recip = not is_f32          # exact reciprocal only on the f32 path
    two_pass_sum = is_f32              # hi/lo bf16 split keeps f32 accuracy

    in_specs = [pl.BlockSpec((tile_rows, lane_width), lambda i: (i, 0))]
    operands = [x2]
    flops = 8 * n_pad

    if grouped:
        kernel = functools.partial(
            _grouped_softmax_kernel, d=d, use_mxu_sum=use_mxu_sum,
            approx_recip=approx_recip, two_pass_sum=two_pass_sum)
        if use_mxu_sum:
            gid = jnp.arange(lane_width, dtype=jnp.int32) // d
            bdiag = (gid[:, None] == gid[None, :]).astype(jnp.bfloat16)
            # Constant index_map -> fetched once, stays resident across steps.
            in_specs.append(
                pl.BlockSpec((lane_width, lane_width), lambda i: (0, 0)))
            operands.append(bdiag)
            flops += 2 * rows_pad * lane_width * lane_width * (2 if two_pass_sum else 1)
    else:
        kernel = functools.partial(_rowwise_softmax_kernel,
                                   approx_recip=approx_recip)

    out2 = pl.pallas_call(
        kernel,
        out_shape=jax.ShapeDtypeStruct((rows_pad, lane_width), dt),
        grid_spec=pltpu.PrefetchScalarGridSpec(
            num_scalar_prefetch=0,
            grid=grid,
            in_specs=in_specs,
            out_specs=pl.BlockSpec((tile_rows, lane_width), lambda i: (i, 0)),
        ),
        compiler_params=pltpu.CompilerParams(
            dimension_semantics=("parallel",),     # shards grid across TCs on v7x
            vmem_limit_bytes=vmem_limit,
        ),
        cost_estimate=pl.CostEstimate(
            flops=flops,
            transcendentals=n_pad,
            bytes_accessed=2 * n_pad * dt.itemsize,
        ),
    )(*operands)

    out_flat = out2.reshape(-1)
    if n_pad != n:
        out_flat = out_flat[:n]
    return out_flat.reshape(x_shape)


# ---------------------------------------------------------------------------
# Self-test
# ---------------------------------------------------------------------------

def _reference(x, internal_dim):
    xs = x.shape
    xf = x.astype(jnp.float32).reshape(*xs[:-1], -1, internal_dim)
    return jax.nn.softmax(xf, axis=-1).reshape(xs).astype(x.dtype)


if __name__ == "__main__":
    key = jax.random.PRNGKey(0)
    cases = [
        # (shape,            dtype,        d,   max_tile, rtol,  atol)
        ((2, 4, 16, 32),     jnp.float32,  8,   None,     1e-5,  1e-6),  # d|128 fast path
        ((4, 8, 32, 128),    jnp.bfloat16, 8,   8192,     2e-2,  2e-2),  # bf16, multi-step grid
        ((2, 4, 16, 48),     jnp.float32,  12,  None,     1e-5,  1e-6),  # non-pow2 groups, L=384
        ((3, 5, 16),         jnp.float32,  8,   None,     1e-5,  1e-6),  # padded (rows < 8)
        ((2, 4, 256),        jnp.float32,  128, None,     1e-5,  1e-6),  # internal_dim % 128 == 0
    ]
    for i, (shape, dtype, d, max_tile, rtol, atol) in enumerate(cases):
        key, sub = jax.random.split(key)
        x = jax.random.normal(sub, shape, dtype=jnp.float32).astype(dtype)

        out = softmax_layer(x, internal_dim=d, max_tile_elems=max_tile)
        out = jax.block_until_ready(out)

        ref = _reference(x, d)
        np.testing.assert_allclose(
            np.asarray(out.astype(jnp.float32)),
            np.asarray(ref.astype(jnp.float32)),
            rtol=rtol, atol=atol,
            err_msg=f"case {i}: shape={shape} internal_dim={d}",
        )
        assert out.shape == x.shape and out.dtype == x.dtype

    print("KERNEL_OK")
</pallas_src>

<mosaic_0001>
module attributes {stable_mosaic.version = 11 : i64} {
  func.func @_grouped_softmax_kernel(%arg0: i32, %arg1: memref<16x128xf32, #tpu.memory_space<vmem>>, %arg2: memref<128x128xbf16, #tpu.memory_space<vmem>>, %arg3: memref<16x128xf32, #tpu.memory_space<vmem>>) attributes {dimension_semantics = [#tpu.dimension_semantics<parallel>], iteration_bounds = array<i64: 2>, scalar_prefetch = 0 : i64, scratch_operands = 0 : i64, tpu.core_type = #tpu.core_type<tc>, window_params = [{transform_indices = @transform_0, window_bounds = array<i64: 16, 128>}, {pipeline_mode = #tpu.pipeline_mode<synchronous>, transform_indices = @transform_1, window_bounds = array<i64: 128, 128>}, {transform_indices = @transform_2, window_bounds = array<i64: 16, 128>}]} {
    %c0 = arith.constant 0 : index
    %c0_0 = arith.constant 0 : index
    %0 = vector.load %arg1[%c0, %c0_0] : memref<16x128xf32, #tpu.memory_space<vmem>>, vector<16x128xf32>
    %1 = tpu.iota {dimensions = array<i32: 1>} : vector<1x128xi32>
    %c7_i32 = arith.constant 7 : i32
    %2 = vector.broadcast %c7_i32 : i32 to vector<1x128xi32>
    %3 = arith.andi %1, %2 : vector<1x128xi32>
    %c1_i32 = arith.constant 1 : i32
    %4 = tpu.dynamic_rotate %1 by %c1_i32 dim 1 : vector<1x128xi32>, i32 -> vector<1x128xi32>
    %c127_i32 = arith.constant 127 : i32
    %5 = vector.broadcast %c127_i32 : i32 to vector<1x128xi32>
    %6 = arith.cmpi eq, %1, %5 : vector<1x128xi32>
    %c1_i32_1 = arith.constant 1 : i32
    %7 = vector.broadcast %c1_i32_1 : i32 to vector<1x128xi32>
    %8 = arith.addi %1, %7 : vector<1x128xi32>
    %c0_i32 = arith.constant 0 : i32
    %9 = vector.broadcast %c0_i32 : i32 to vector<1x128xi32>
    %10 = arith.select %6, %9, %8 : vector<1x128xi1>, vector<1x128xi32>
    %11 = arith.cmpi eq, %4, %10 : vector<1x128xi32>
    %c7_i32_2 = arith.constant 7 : i32
    %12 = vector.broadcast %c7_i32_2 : i32 to vector<1x128xi32>
    %13 = arith.subi %12, %3 : vector<1x128xi32>
    %14 = arith.select %11, %3, %13 : vector<1x128xi1>, vector<1x128xi32>
    %c1_i32_3 = arith.constant 1 : i32
    %15 = tpu.dynamic_rotate %0 by %c1_i32_3 dim 1 : vector<16x128xf32>, i32 -> vector<16x128xf32>
    %c121_i32 = arith.constant 121 : i32
    %16 = tpu.dynamic_rotate %0 by %c121_i32 dim 1 : vector<16x128xf32>, i32 -> vector<16x128xf32>
    %c7_i32_4 = arith.constant 7 : i32
    %17 = vector.broadcast %c7_i32_4 : i32 to vector<1x128xi32>
    %18 = arith.cmpi slt, %14, %17 : vector<1x128xi32>
    %19 = vector.shape_cast %18 : vector<1x128xi1> to vector<1x128xi1>
    %20 = vector.broadcast %19 : vector<1x128xi1> to vector<16x128xi1>
    %21 = arith.select %20, %15, %16 : vector<16x128xi1>, vector<16x128xf32>
    %22 = arith.maximumf %0, %21 : vector<16x128xf32>
    %c2_i32 = arith.constant 2 : i32
    %23 = tpu.dynamic_rotate %22 by %c2_i32 dim 1 : vector<16x128xf32>, i32 -> vector<16x128xf32>
    %c122_i32 = arith.constant 122 : i32
    %24 = tpu.dynamic_rotate %22 by %c122_i32 dim 1 : vector<16x128xf32>, i32 -> vector<16x128xf32>
    %c6_i32 = arith.constant 6 : i32
    %25 = vector.broadcast %c6_i32 : i32 to vector<1x128xi32>
    %26 = arith.cmpi slt, %14, %25 : vector<1x128xi32>
    %27 = vector.shape_cast %26 : vector<1x128xi1> to vector<1x128xi1>
    %28 = vector.broadcast %27 : vector<1x128xi1> to vector<16x128xi1>
    %29 = arith.select %28, %23, %24 : vector<16x128xi1>, vector<16x128xf32>
    %30 = arith.maximumf %22, %29 : vector<16x128xf32>
    %c4_i32 = arith.constant 4 : i32
    %31 = tpu.dynamic_rotate %30 by %c4_i32 dim 1 : vector<16x128xf32>, i32 -> vector<16x128xf32>
    %c124_i32 = arith.constant 124 : i32
    %32 = tpu.dynamic_rotate %30 by %c124_i32 dim 1 : vector<16x128xf32>, i32 -> vector<16x128xf32>
    %c4_i32_5 = arith.constant 4 : i32
    %33 = vector.broadcast %c4_i32_5 : i32 to vector<1x128xi32>
    %34 = arith.cmpi slt, %14, %33 : vector<1x128xi32>
    %35 = vector.shape_cast %34 : vector<1x128xi1> to vector<1x128xi1>
    %36 = vector.broadcast %35 : vector<1x128xi1> to vector<16x128xi1>
    %37 = arith.select %36, %31, %32 : vector<16x128xi1>, vector<16x128xf32>
    %38 = arith.maximumf %30, %37 : vector<16x128xf32>
    %39 = arith.subf %0, %38 : vector<16x128xf32>
    %40 = math.exp %39 : vector<16x128xf32>
    %c0_6 = arith.constant 0 : index
    %c0_7 = arith.constant 0 : index
    %41 = vector.load %arg2[%c0_6, %c0_7] : memref<128x128xbf16, #tpu.memory_space<vmem>>, vector<128x128xbf16>
    %42 = arith.truncf %40 : vector<16x128xf32> to vector<16x128xbf16>
    %cst = arith.constant dense<0.000000e+00> : vector<16x128xf32>
    %43 = tpu.matmul %42, %41, %cst {dimension_numbers = #tpu.dot_dimension_numbers<[1], [0], [0], [1], [0, 0, 1, 1], [], []>} : vector<16x128xbf16>, vector<128x128xbf16>, vector<16x128xf32> -> vector<16x128xf32>
    %44 = arith.extf %42 : vector<16x128xbf16> to vector<16x128xf32>
    %45 = arith.subf %40, %44 : vector<16x128xf32>
    %46 = arith.truncf %45 : vector<16x128xf32> to vector<16x128xbf16>
    %cst_8 = arith.constant dense<0.000000e+00> : vector<16x128xf32>
    %47 = tpu.matmul %46, %41, %cst_8 {dimension_numbers = #tpu.dot_dimension_numbers<[1], [0], [0], [1], [0, 0, 1, 1], [], []>} : vector<16x128xbf16>, vector<128x128xbf16>, vector<16x128xf32> -> vector<16x128xf32>
    %48 = arith.addf %43, %47 : vector<16x128xf32>
    %49 = tpu.reciprocal %48 : vector<16x128xf32> -> vector<16x128xf32>
    %50 = arith.mulf %40, %49 : vector<16x128xf32>
    %c0_9 = arith.constant 0 : index
    %c0_10 = arith.constant 0 : index
    %51 = vector.load %arg3[%c0_9, %c0_10] : memref<16x128xf32, #tpu.memory_space<vmem>>, vector<16x128xf32>
    tpu.vector_store %arg3[%c0_9, %c0_10], %50 {strides = array<i32>} : memref<16x128xf32, #tpu.memory_space<vmem>>, vector<16x128xf32>,
    return
  }
  func.func @transform_0(%arg0: i32) -> (i32, i32) {
    %c0_i32 = arith.constant 0 : i32
    %c0_i32_0 = arith.constant 0 : i32
    return %arg0, %c0_i32 : i32, i32
  }
  func.func @transform_1(%arg0: i32) -> (i32, i32) {
    %c0_i32 = arith.constant 0 : i32
    %c0_i32_0 = arith.constant 0 : i32
    %c0_i32_1 = arith.constant 0 : i32
    return %c0_i32, %c0_i32_0 : i32, i32
  }
  func.func @transform_2(%arg0: i32) -> (i32, i32) {
    %c0_i32 = arith.constant 0 : i32
    %c0_i32_0 = arith.constant 0 : i32
    return %arg0, %c0_i32 : i32, i32
  }
}

</mosaic_0001>

<llo_original>
// kernel: softmax_layer.1
$region0: #{softmax_layer.1}
  #allocation0 [shape = 'u32[]', space=smem, size = 0x4, offset = 0x4, fixed_abs, tag = 'smem constant byte address 0x4 - core index']
  #allocation1 [shape = 'u32[144,128]{1,0:T(1,128)}', space=vmem, size = 0x12000, scoped, tag = 'internal scratch']
  %s0 = inlined_call_operand.vmem [shape: f32[32,128], index: 0, kind: input, shape index: {}]
  %s1 = inlined_call_operand.vmem [shape: bf16[128,128], index: 1, kind: input, shape index: {}]
  %s2 = inlined_call_operand.vmem [shape: f32[32,128], index: 2, kind: output, shape index: {}]
  %s3 = sld [smem:[#allocation0]]
  $region41: #{softmax_layer.1} parent=0
    _
  %s5 = ssub.s32 1, %s3
  %s6 = scalar_select 0, %s5, %s3
  loop: start=0, step=1, limit=4
  $region2: #{softmax_layer.1} parent=0 // loop_pre_header
    _
  $region3: #{softmax_layer.1} parent=0 // loop_header
    %s8 = sphi 0, %s12
    %p9 = scmp.ge.s32.totalorder %s8, 4
    %s18 = sphi 0, %s20
    %s21 = sphi 0, %s18
    %s22 = sphi 0, %s21
    %s38 = sphi 0, %s22
    %s42 = sphi 0, %s42
    %s44 = sphi 0, %s42
    %s45 = sphi 0, %s44
    %s59 = sphi 0, %s45
    %s65 = sphi 0, %s67
    %s68 = sphi 0, %s65
    %s69 = sphi 0, %s68
    %s85 = sphi 0, %s69
  $region4: #{softmax_layer.1} parent=0 // loop_header_branch
    %11 = sbr.rel (%p9) target = $region8
  $region5: #{softmax_layer.1} parent=0 // loop_body
    %s13 = ssub.s32 %s8, 1
    %s14 = ssub.s32 %s8, 2
    %s15 = sadd.s32 %s8, 1
    %s16 = ssub.s32 %s8, %s15
    %p17 = scmp.eq.s32.totalorder %s16, 0
    %s19 = sadd.s32 %s18, 1
    %s20 = scalar_select %p17, %s18, %s19
    %p23 = pneg %p17
    %p24 = scmp.eq.s32.totalorder %s8, 1
    %p25 = por %p23, %p24
    %p26 = scmp.ne.s32.totalorder %s18, %s21
    %p27 = scmp.eq.s32.totalorder %s8, 0
    %p28 = por %p26, %p27
    %p29 = scmp.ne.s32.totalorder %s18, %s21
    %p30 = scmp.eq.s32.totalorder %s13, 1
    %p31 = por %p29, %p30
    %p32 = scmp.ne.s32.totalorder %s21, %s22
    %p33 = scmp.eq.s32.totalorder %s13, 0
    %p34 = por %p32, %p33
    %p35 = scmp.ne.s32.totalorder %s21, %s22
    %p36 = scmp.eq.s32.totalorder %s14, 1
    %p37 = por %p35, %p36
    %p39 = scmp.ne.s32.totalorder %s22, %s38
    %p40 = scmp.eq.s32.totalorder %s14, 0
    %p41 = por %p39, %p40
    %s43 = sadd.s32 %s42, 1
    %p46 = scmp.eq.s32.totalorder %s8, 1
    %p47 = scmp.ne.s32.totalorder %s42, %s44
    %p48 = scmp.eq.s32.totalorder %s8, 0
    %p49 = por %p47, %p48
    %p50 = scmp.ne.s32.totalorder %s42, %s44
    %p51 = scmp.eq.s32.totalorder %s13, 1
    %p52 = por %p50, %p51
    %p53 = scmp.ne.s32.totalorder %s44, %s45
    %p54 = scmp.eq.s32.totalorder %s13, 0
    %p55 = por %p53, %p54
    %p56 = scmp.ne.s32.totalorder %s44, %s45
    %p57 = scmp.eq.s32.totalorder %s14, 1
    %p58 = por %p56, %p57
    %p60 = scmp.ne.s32.totalorder %s45, %s59
    %p61 = scmp.eq.s32.totalorder %s14, 0
    %p62 = por %p60, %p61
    %s63 = ssub.s32 %s8, %s15
    %p64 = scmp.eq.s32.totalorder %s63, 0
    %s66 = sadd.s32 %s65, 1
    %s67 = scalar_select %p64, %s65, %s66
    %p70 = pneg %p64
    %p71 = scmp.eq.s32.totalorder %s8, 1
    %p72 = por %p70, %p71
    %p73 = scmp.ne.s32.totalorder %s65, %s68
    %p74 = scmp.eq.s32.totalorder %s8, 0
    %p75 = por %p73, %p74
    %p76 = scmp.ne.s32.totalorder %s65, %s68
    %p77 = scmp.eq.s32.totalorder %s13, 1
    %p78 = por %p76, %p77
    %p79 = scmp.ne.s32.totalorder %s68, %s69
    %p80 = scmp.eq.s32.totalorder %s13, 0
    %p81 = por %p79, %p80
    %p82 = scmp.ne.s32.totalorder %s68, %s69
    %p83 = scmp.eq.s32.totalorder %s14, 1
    %p84 = por %p82, %p83
    %p86 = scmp.ne.s32.totalorder %s69, %s85
    %p87 = scmp.eq.s32.totalorder %s14, 0
    %p88 = por %p86, %p87
    %p89 = scmp.le.s32.totalorder 1, %s8
    %p90 = scmp.lt.s32.totalorder %s8, 3
    %p91 = pnand %p89, %p90
    %p92 = pneg %p91
    // Predicated region
    $region9: #{softmax_layer.1} parent=5 // pred_check
      _
    $region10: #{softmax_layer.1} parent=5 // pred_check_branch
      %94 = sbr.rel (%p91) target = $region12
    $region11: #{softmax_layer.1} parent=5 // pred_region
      %s95 = ssub.s32 %s8, 1
      // Predicated region
      $region13: #{softmax_layer.1} parent=11 // pred_check
        %p96 = pneg %p55
      $region14: #{softmax_layer.1} parent=11 // pred_check_branch
        %98 = sbr.rel (%p96) target = $region16
      $region15: #{softmax_layer.1} parent=11 // pred_region
        _
      $region16: #{softmax_layer.1} parent=11 // pred_fallthru
        _
    $region12: #{softmax_layer.1} parent=5 // pred_fallthru
      _
    %p99 = scmp.lt.s32.totalorder %s8, 2
    // Predicated region
    $region17: #{softmax_layer.1} parent=5 // pred_check
      %p100 = pneg %p99
    $region18: #{softmax_layer.1} parent=5 // pred_check_branch
      %102 = sbr.rel (%p100) target = $region20
    $region19: #{softmax_layer.1} parent=5 // pred_region
      // Predicated region
      $region21: #{softmax_layer.1} parent=19 // pred_check
        %p103 = pneg %p28
      $region22: #{softmax_layer.1} parent=19 // pred_check_branch
        %105 = sbr.rel (%p103) target = $region24
      $region23: #{softmax_layer.1} parent=19 // pred_region
        %s106 = smul.u32 2, %s8
        %p107 = scmp.lt.s32.totalorder %s106, 3
        %s108 = scalar_select %p107, %s106, 3
        %s109 = smul.addr %s108, 8
        %s110 = scalar_lea.vmem %s0, %s109
        %s111 = smul.u32 2, %s8
      $region24: #{softmax_layer.1} parent=19 // pred_fallthru
        _
    $region20: #{softmax_layer.1} parent=5 // pred_fallthru
      _
    %p112 = scmp.le.s32.totalorder 1, %s8
    %p113 = scmp.lt.s32.totalorder %s8, 3
    %p114 = pnand %p112, %p113
    %p115 = pneg %p114
    // Predicated region
    $region25: #{softmax_layer.1} parent=5 // pred_check
      _
    $region26: #{softmax_layer.1} parent=5 // pred_check_branch
      %117 = sbr.rel (%p114) target = $region28
    $region27: #{softmax_layer.1} parent=5 // pred_region
      %s118 = ssub.s32 %s8, 1
      %s119 = smul.u32 2, %s13
      %p120 = scmp.lt.s32.totalorder %s119, 3
      %s121 = scalar_select %p120, %s119, 3
      %s122 = smul.addr %s121, 8
      %s123 = scalar_lea.vmem %s0, %s122
      %p124 = pneg %p34
      %p125 = pneg %p31
      %p126 = pneg %p55
      %p127 = pneg %p52
      %p128 = pneg %p81
      %p129 = pneg %p78
      %s130 = smul.u32 2, %s13
      %p131 = scmp.lt.s32.totalorder %s130, 3
      %s132 = scalar_select %p131, %s130, 3
      %s133 = smul.addr %s132, 8
      %s134 = scalar_lea.vmem %s2, %s133
      %s135 = smul.u32 2, %s13
      %p136 = scmp.lt.s32.totalorder %s135, 3
      %s137 = scalar_select %p136, %s135, 3
      %s138 = smul.addr %s137, 8
      %s139 = scalar_lea.vmem %s0, %s138
      %s140 = smul.u32 2, %s13
      %s141 = smul.u32 2, %s13
      %p142 = scmp.lt.s32.totalorder %s141, 3
      %s143 = scalar_select %p142, %s141, 3
      %s144 = smul.addr %s143, 8
      %s145 = scalar_lea.vmem %s2, %s144
      %s146 = smul.u32 2, %s13
      %v148 = vld [vmem:[%s139] sm:$0xff]
      %v149 = vld [vmem:[%s139 + $0x8] sm:$0xff]
      %v150 = vlaneseq
      %v151 = vand.u32 %v150, 127
      %v152 = vand.u32 %v151, 7
      %153 = vrot.lane.b32.xlu0 %v151, 1
      %v154 = vpop.permute.xlu0 %153
      %vm155 = vcmp.eq.s32.totalorder %v151, 127
      %v156 = vadd.s32 %v151, 1
      %v157 = vsel %vm155, 0, %v156
      %vm158 = vcmp.eq.s32.totalorder %v154, %v157
      %v159 = vsub.s32 7, %v152
      %v160 = vsel %vm158, %v152, %v159
      %161 = vrot.lane.b32.xlu0 %v148, 1
      %v162 = vpop.permute.xlu0 %161
      %163 = vrot.lane.b32.xlu0 %v149, 1
      %v164 = vpop.permute.xlu0 %163
      %165 = vrot.lane.b32.xlu0 %v148, 121
      %v166 = vpop.permute.xlu0 %165
      %167 = vrot.lane.b32.xlu0 %v149, 121
      %v168 = vpop.permute.xlu0 %167
      %vm169 = vcmp.lt.s32.totalorder %v160, 7
      %v170 = vsel %vm169, 1, 0
      %v171 = vlaneseq
      %v172 = vshrl.u32 %v171, 7
      %v173 = vsub.s32 0, %v172
      %v174 = vrot.slane %v170, %v173
      %vm175 = vcmp.eq.s32.totalorder %v174, 1
      %v176 = vsel %vm175, %v162, %v166
      %v177 = vsel %vm175, %v164, %v168
      %v178 = vmax.f32 %v148, %v176
      %v179 = vmax.f32 %v149, %v177
      %180 = vrot.lane.b32.xlu0 %v178, 2
      %v181 = vpop.permute.xlu0 %180
      %182 = vrot.lane.b32.xlu0 %v179, 2
      %v183 = vpop.permute.xlu0 %182
      %184 = vrot.lane.b32.xlu0 %v178, 122
      %v185 = vpop.permute.xlu0 %184
      %186 = vrot.lane.b32.xlu0 %v179, 122
      %v187 = vpop.permute.xlu0 %186
      %vm188 = vcmp.lt.s32.totalorder %v160, 6
      %v189 = vsel %vm188, 1, 0
      %v190 = vlaneseq
      %v191 = vshrl.u32 %v190, 7
      %v192 = vsub.s32 0, %v191
      %v193 = vrot.slane %v189, %v192
      %vm194 = vcmp.eq.s32.totalorder %v193, 1
      %v195 = vsel %vm194, %v181, %v185
      %v196 = vsel %vm194, %v183, %v187
      %v197 = vmax.f32 %v178, %v195
      %v198 = vmax.f32 %v179, %v196
      %199 = vrot.lane.b32.xlu0 %v197, 4
      %v200 = vpop.permute.xlu0 %199
      %201 = vrot.lane.b32.xlu0 %v198, 4
      %v202 = vpop.permute.xlu0 %201
      %203 = vrot.lane.b32.xlu0 %v197, 124
      %v204 = vpop.permute.xlu0 %203
      %205 = vrot.lane.b32.xlu0 %v198, 124
      %v206 = vpop.permute.xlu0 %205
      %vm207 = vcmp.lt.s32.totalorder %v160, 4
      %v208 = vsel %vm207, 1, 0
      %v209 = vlaneseq
      %v210 = vshrl.u32 %v209, 7
      %v211 = vsub.s32 0, %v210
      %v212 = vrot.slane %v208, %v211
      %vm213 = vcmp.eq.s32.totalorder %v212, 1
      %v214 = vsel %vm213, %v200, %v204
      %v215 = vsel %vm213, %v202, %v206
      %v216 = vmax.f32 %v197, %v214
      %v217 = vmax.f32 %v198, %v215
      %v218 = vsub.f32 %v148, %v216
      %v219 = vsub.f32 %v149, %v217
      %v220 = vmul.f32 %v218, 1.442695
      %v221 = vpow.pop %v220
      %v222 = vmul.f32 %v219, 1.442695
      %v223 = vpow.pop %v222
      %v224 = vld [vmem:[%s1] sm:$0xf]
      %v225 = vld [vmem:[%s1 + $0x4] sm:$0xf]
      %v226 = vld [vmem:[%s1 + $0x8] sm:$0xf]
      %v227 = vld [vmem:[%s1 + $0xc] sm:$0xf]
      %v228 = vld [vmem:[%s1 + $0x10] sm:$0xf]
      %v229 = vld [vmem:[%s1 + $0x14] sm:$0xf]
      %v230 = vld [vmem:[%s1 + $0x18] sm:$0xf]
      %v231 = vld [vmem:[%s1 + $0x1c] sm:$0xf]
      %v232 = vld [vmem:[%s1 + $0x20] sm:$0xf]
      %v233 = vld [vmem:[%s1 + $0x24] sm:$0xf]
      %v234 = vld [vmem:[%s1 + $0x28] sm:$0xf]
      %v235 = vld [vmem:[%s1 + $0x2c] sm:$0xf]
      %v236 = vld [vmem:[%s1 + $0x30] sm:$0xf]
      %v237 = vld [vmem:[%s1 + $0x34] sm:$0xf]
      %v238 = vld [vmem:[%s1 + $0x38] sm:$0xf]
      %v239 = vld [vmem:[%s1 + $0x3c] sm:$0xf]
      %v240 = vpack.c.bf16 %v223, %v221
      %v241 = vunpack.c.l.bf16 %v240
      %v242 = vunpack.c.h.bf16 %v240
      %v243 = vsub.f32 %v221, %v241
      %v244 = vsub.f32 %v223, %v242
      %v245 = vpack.c.bf16 %v244, %v243
      %v262 = vunpack.c.l.b16 %v224
      %v263 = vunpack.c.l.b16 %v225
      %v264 = vunpack.c.l.b16 %v226
      %v265 = vunpack.c.l.b16 %v227
      %v266 = vunpack.c.l.b16 %v228
      %v267 = vunpack.c.l.b16 %v229
      %v268 = vunpack.c.l.b16 %v230
      %v269 = vunpack.c.l.b16 %v231
      %v270 = vunpack.c.l.b16 %v232
      %v271 = vunpack.c.l.b16 %v233
      %v272 = vunpack.c.l.b16 %v234
      %v273 = vunpack.c.l.b16 %v235
      %v274 = vunpack.c.l.b16 %v236
      %v275 = vunpack.c.l.b16 %v237
      %v276 = vunpack.c.l.b16 %v238
      %v277 = vunpack.c.l.b16 %v239
      %v278 = vpack.c.b16 %v263, %v262
      %v279 = vpack.c.b16 %v265, %v264
      %v280 = vpack.c.b16 %v267, %v266
      %v281 = vpack.c.b16 %v269, %v268
      %v282 = vpack.c.b16 %v271, %v270
      %v283 = vpack.c.b16 %v273, %v272
      %v284 = vpack.c.b16 %v275, %v274
      %v285 = vpack.c.b16 %v277, %v276
      %294 = vmatprep.subr.bf16.mxu0 0
      %295 = vmatpush1.bf16.msra.mxu0 %v285
      %296 = vmatprep.subr.bf16.mxu0 0
      %297 = vmatpush1.bf16.msra.mxu0 %v284
      %298 = vmatprep.subr.bf16.mxu0 0
      %299 = vmatpush1.bf16.msra.mxu0 %v283
      %300 = vmatprep.subr.bf16.mxu0 0
      %301 = vmatpush1.bf16.msra.mxu0 %v282
      %302 = vmatprep.subr.bf16.mxu0 0
      %303 = vmatpush1.bf16.msra.mxu0 %v281
      %304 = vmatprep.subr.bf16.mxu0 0
      %305 = vmatpush1.bf16.msra.mxu0 %v280
      %306 = vmatprep.subr.bf16.mxu0 0
      %307 = vmatpush1.bf16.msra.mxu0 %v279
      %308 = vmatprep.subr.bf16.mxu0 0
      %309 = vmatpush1.bf16.msra.mxu0 %v278
      %310 = vmatprep.subr.bf16.mxu0 0
      %311 = vmatpush2.bf16.msra.mxu0 0
      %312 = vmatprep.subr.bf16.mxu0 0
      %313 = vmatpush2.bf16.msra.mxu0 0
      %314 = vmatprep.subr.bf16.mxu0 0
      %315 = vmatpush2.bf16.msra.mxu0 0
      %316 = vmatprep.subr.bf16.mxu0 0
      %317 = vmatpush2.bf16.msra.mxu0 0
      %318 = vmatprep.subr.bf16.mxu0 0
      %319 = vmatpush2.bf16.msra.mxu0 0
      %320 = vmatprep.subr.bf16.mxu0 0
      %321 = vmatpush2.bf16.msra.mxu0 0
      %322 = vmatprep.subr.bf16.mxu0 0
      %323 = vmatpush2.bf16.msra.mxu0 0
      %324 = vmatprep.subr.bf16.mxu0 0
      %325 = vmatpush2.bf16.msra.mxu0 0
      %326 = vmatprep.mubr.bf16.mxu0 0
      %327 = vmatmul.mubr.bf16.gmra.mxu0 %v245
      %v328 = vpop.f32.mrf.mxu0
      %v329 = vadd.f32 0.0, %v328
      %v330 = vpop.f32.mrf.mxu0
      %v331 = vpop.f32.mrf.mxu0
      %v332 = vadd.f32 0.0, %v331
      %v333 = vpop.f32.mrf.mxu0
      %334 = vdwg.mxu0
      %335 = vmatprep.subr.bf16.mxu0 0
      %336 = vmatpush1.bf16.msra.mxu0 %v285
      %337 = vmatprep.subr.bf16.mxu0 0
      %338 = vmatpush1.bf16.msra.mxu0 %v284
      %339 = vmatprep.subr.bf16.mxu0 0
      %340 = vmatpush1.bf16.msra.mxu0 %v283
      %341 = vmatprep.subr.bf16.mxu0 0
      %342 = vmatpush1.bf16.msra.mxu0 %v282
      %343 = vmatprep.subr.bf16.mxu0 0
      %344 = vmatpush1.bf16.msra.mxu0 %v281
      %345 = vmatprep.subr.bf16.mxu0 0
      %346 = vmatpush1.bf16.msra.mxu0 %v280
      %347 = vmatprep.subr.bf16.mxu0 0
      %348 = vmatpush1.bf16.msra.mxu0 %v279
      %349 = vmatprep.subr.bf16.mxu0 0
      %350 = vmatpush1.bf16.msra.mxu0 %v278
      %351 = vmatprep.subr.bf16.mxu0 0
      %352 = vmatpush2.bf16.msra.mxu0 0
      %353 = vmatprep.subr.bf16.mxu0 0
      %354 = vmatpush2.bf16.msra.mxu0 0
      %355 = vmatprep.subr.bf16.mxu0 0
      %356 = vmatpush2.bf16.msra.mxu0 0
      %357 = vmatprep.subr.bf16.mxu0 0
      %358 = vmatpush2.bf16.msra.mxu0 0
      %359 = vmatprep.subr.bf16.mxu0 0
      %360 = vmatpush2.bf16.msra.mxu0 0
      %361 = vmatprep.subr.bf16.mxu0 0
      %362 = vmatpush2.bf16.msra.mxu0 0
      %363 = vmatprep.subr.bf16.mxu0 0
      %364 = vmatpush2.bf16.msra.mxu0 0
      %365 = vmatprep.subr.bf16.mxu0 0
      %366 = vmatpush2.bf16.msra.mxu0 0
      %367 = vmatprep.mubr.bf16.mxu0 0
      %368 = vmatmul.mubr.bf16.gmra.mxu0 %v240
      %v369 = vpop.f32.mrf.mxu0
      %v370 = vadd.f32 %v329, %v369
      %v371 = vpop.f32.mrf.mxu0
      %v372 = vpop.f32.mrf.mxu0
      %v373 = vadd.f32 %v332, %v372
      %v374 = vpop.f32.mrf.mxu0
      %375 = vdwg.mxu0
      %v376 = vrcp.pop %v370
      %v377 = vrcp.pop %v373
      %v378 = vmul.f32 %v221, %v376
      %v379 = vmul.f32 %v223, %v377
      %380 = vst [vmem:[%s145] sm:$0xff] %v378
      %381 = vst [vmem:[%s145 + $0x8] sm:$0xff] %v379
      %s382 = smul.u32 2, %s13
      %p383 = scmp.lt.s32.totalorder %s382, 3
      %s384 = scalar_select %p383, %s382, 3
      %s385 = smul.addr %s384, 8
      %s386 = scalar_lea.vmem %s2, %s385
      // Predicated region
      $region29: #{softmax_layer.1} parent=27 // pred_check
        %p387 = pneg %p78
      $region30: #{softmax_layer.1} parent=27 // pred_check_branch
        %389 = sbr.rel (%p387) target = $region32
      $region31: #{softmax_layer.1} parent=27 // pred_region
        %s390 = smul.u32 2, %s13
      $region32: #{softmax_layer.1} parent=27 // pred_fallthru
        _
    $region28: #{softmax_layer.1} parent=5 // pred_fallthru
      _
    %p391 = scmp.le.s32.totalorder 2, %s8
    // Predicated region
    $region33: #{softmax_layer.1} parent=5 // pred_check
      %p392 = pneg %p391
    $region34: #{softmax_layer.1} parent=5 // pred_check_branch
      %394 = sbr.rel (%p392) target = $region36
    $region35: #{softmax_layer.1} parent=5 // pred_region
      %s395 = ssub.s32 %s8, 2
      // Predicated region
      $region37: #{softmax_layer.1} parent=35 // pred_check
        %p396 = pneg %p84
      $region38: #{softmax_layer.1} parent=35 // pred_check_branch
        %398 = sbr.rel (%p396) target = $region40
      $region39: #{softmax_layer.1} parent=35 // pred_region
        %s399 = smul.u32 2, %s14
        %p400 = scmp.lt.s32.totalorder %s399, 3
        %s401 = scalar_select %p400, %s399, 3
        %s402 = smul.addr %s401, 8
        %s403 = scalar_lea.vmem %s2, %s402
      $region40: #{softmax_layer.1} parent=35 // pred_fallthru
        _
    $region36: #{softmax_layer.1} parent=5 // pred_fallthru
      _
  $region6: #{softmax_layer.1} parent=0 // loop_footer
    %s12 = sadd.s32 1, %s8
  $region7: #{softmax_layer.1} parent=0 // loop_footer_branch
    %7 = sbr.rel target = $region3
  $region8: #{softmax_layer.1} parent=0 // loop_exit
    _

</llo_original>
